<compile_context>
chip_gen: v6e
topology: v6e:2x2x1
jax: 0.10.0
libtpu: 0.0.40
codegen_flags: <defaults>
</compile_context>

<pallas_src>
import jax
import jax.numpy as jnp
from jax.experimental import pallas as pl
from jax.experimental.pallas import tpu as pltpu

# ------------------------- model dims (small, synthetic) -------------------------
B = 2          # batch
S = 8          # sequence length
H = 32         # base_model.config.hidden_size
D1 = 4096      # layer1 output dim (hard-coded in the module)
VOCAB = 100


# ------------------------------- Pallas kernel -----------------------------------
def critic_kernel(feat_ref, mask_ref, w1_ref, b1_ref, w3_ref, b3_ref, out_ref):
    # -- masked mean pooling (f32 math, exact divide), cast to bf16 for the MXU --
    feat = feat_ref[...]                                   # (B, S, H) f32
    mask = mask_ref[...]                                   # (B, S)    f32 (0/1)
    masked = feat * mask[:, :, None]                       # (B, S, H)
    num = jnp.sum(masked, axis=1)                          # (B, H)
    den = jnp.maximum(jnp.sum(mask, axis=1, keepdims=True), 1e-9)   # (B, 1)
    pooled = (num / den).astype(jnp.bfloat16)              # (B, H) bf16

    # -- layer1: (B,H) x (H,D1) on the MXU, f32 accumulation, +b1, ReLU ----------
    x = jnp.dot(pooled, w1_ref[...],
                preferred_element_type=jnp.float32)        # (B, D1) f32
    x = jnp.maximum(x + b1_ref[...], 0.0)

    # -- layer3: lane-dense W3 row -> VPU multiply + lane reduction --------------
    val = jnp.sum(x * w3_ref[...], axis=-1, keepdims=True)  # (B, 1) f32

    # -- +b3 (scalar from SMEM) and store ----------------------------------------
    out_ref[...] = val + b3_ref[0, 0]


def critic_forward(features, attention_mask, w1_bf16, b1, w3_row, b3):
    """features: (B,S,H) f32, attention_mask: (B,S) f32 -> value: (B,) f32.

    w1_bf16: (H, D1) bf16, b1: (1, D1) f32, w3_row: (1, D1) f32, b3: (1,1) f32.
    """
    b = features.shape[0]
    vmem = pl.BlockSpec(memory_space=pltpu.MemorySpace.VMEM)
    out = pl.pallas_call(
        critic_kernel,
        out_shape=jax.ShapeDtypeStruct((b, 1), jnp.float32),
        in_specs=[
            vmem,                                               # features (whole array)
            vmem,                                               # attention_mask
            vmem,                                               # W1 (bf16, 256 KiB)
            vmem,                                               # b1
            vmem,                                               # W3 (lane-dense row)
            pl.BlockSpec(memory_space=pltpu.MemorySpace.SMEM),  # b3 scalar
        ],
        out_specs=vmem,
    )(features, attention_mask, w1_bf16, b1, w3_row, b3)
    return out[:, 0]   # .squeeze(-1)


# ----------------------------- parameter / input setup ---------------------------
def init_params(key):
    k_emb, k_w1, k_b1, k_w3, k_b3 = jax.random.split(key, 5)
    emb = jax.random.normal(k_emb, (VOCAB, H), jnp.float32) * 0.02
    # nn.Linear(H, 4096): weight stored as (H, D1) so forward is pooled @ W1 + b1
    w1 = jax.random.normal(k_w1, (H, D1), jnp.float32) * (1.0 / jnp.sqrt(H))
    b1 = jax.random.normal(k_b1, (1, D1), jnp.float32) * 0.01
    # nn.Linear(4096, 1): weight stored lane-dense as (1, D1)
    w3 = jax.random.normal(k_w3, (1, D1), jnp.float32) * (1.0 / jnp.sqrt(D1))
    b3 = jax.random.normal(k_b3, (1, 1), jnp.float32) * 0.01
    return emb, w1, b1, w3, b3


def synthetic_base_model(emb_table, input_ids):
    # TODO(synk): the real base_model is an arbitrary pretrained transformer;
    # replaced here by a deterministic embedding lookup producing last_hidden_state.
    return emb_table[input_ids]   # (B, S, H)


if __name__ == "__main__":
    key = jax.random.PRNGKey(0)
    k_params, k_ids, k_mask = jax.random.split(key, 3)

    emb, w1_f32, b1, w3, b3 = init_params(k_params)
    w1_bf16 = w1_f32.astype(jnp.bfloat16)

    input_ids = jax.random.randint(k_ids, (B, S), 0, VOCAB)
    # 0/1 attention mask, guarantee first token attended
    attention_mask = (jax.random.uniform(k_mask, (B, S)) > 0.3).astype(jnp.float32)
    attention_mask = attention_mask.at[:, 0].set(1.0)

    features = synthetic_base_model(emb, input_ids)           # (B, S, H)
    value = critic_forward(features, attention_mask, w1_bf16, b1, w3, b3)
    value = jax.block_until_ready(value)

    # reference check in plain JAX (mirrors the kernel's bf16 operand precision)
    mask3 = attention_mask[:, :, None]
    pooled_f32 = (features * mask3).sum(1) / jnp.maximum(
        attention_mask.sum(1, keepdims=True), 1e-9)
    pooled_bf = pooled_f32.astype(jnp.bfloat16).astype(jnp.float32)
    x_ref = jnp.maximum(pooled_bf @ w1_bf16.astype(jnp.float32) + b1, 0.0)
    value_ref = (x_ref * w3).sum(-1) + b3[0, 0]

    assert value.shape == (B,)
    assert jnp.allclose(value, value_ref, atol=2e-3, rtol=2e-2), (value, value_ref)

    print("KERNEL_OK")
</pallas_src>

<mosaic_0001>
module attributes {stable_mosaic.version = 11 : i64} {
  func.func @critic_kernel(%arg0: memref<2x8x32xf32, #tpu.memory_space<vmem>>, %arg1: memref<2x8xf32, #tpu.memory_space<vmem>>, %arg2: memref<32x4096xbf16, #tpu.memory_space<vmem>>, %arg3: memref<1x4096xf32, #tpu.memory_space<vmem>>, %arg4: memref<1x4096xf32, #tpu.memory_space<vmem>>, %arg5: memref<1x1xf32, #tpu.memory_space<smem>>, %arg6: memref<2x1xf32, #tpu.memory_space<vmem>>) attributes {dimension_semantics = [], scalar_prefetch = 0 : i64, scratch_operands = 0 : i64, tpu.core_type = #tpu.core_type<tc>} {
    %c0 = arith.constant 0 : index
    %c0_0 = arith.constant 0 : index
    %c0_1 = arith.constant 0 : index
    %0 = vector.load %arg0[%c0, %c0_0, %c0_1] : memref<2x8x32xf32, #tpu.memory_space<vmem>>, vector<2x8x32xf32>
    %c0_2 = arith.constant 0 : index
    %c0_3 = arith.constant 0 : index
    %1 = vector.load %arg1[%c0_2, %c0_3] : memref<2x8xf32, #tpu.memory_space<vmem>>, vector<2x8xf32>
    %2 = vector.shape_cast %1 : vector<2x8xf32> to vector<2x8x1xf32>
    %3 = vector.broadcast %2 : vector<2x8x1xf32> to vector<2x8x32xf32>
    %4 = arith.mulf %0, %3 : vector<2x8x32xf32>
    %cst = arith.constant dense<0.000000e+00> : vector<2x32xf32>
    %5 = vector.multi_reduction <add>, %4, %cst [1] : vector<2x8x32xf32> to vector<2x32xf32>
    %cst_4 = arith.constant dense<0.000000e+00> : vector<2xf32>
    %6 = vector.multi_reduction <add>, %1, %cst_4 [1] : vector<2x8xf32> to vector<2xf32>
    %7 = vector.shape_cast %6 : vector<2xf32> to vector<2x1xf32>
    %cst_5 = arith.constant 9.99999971E-10 : f32
    %8 = vector.broadcast %cst_5 : f32 to vector<2x1xf32>
    %9 = arith.maximumf %7, %8 : vector<2x1xf32>
    %10 = vector.broadcast %9 : vector<2x1xf32> to vector<2x32xf32>
    %11 = arith.divf %5, %10 : vector<2x32xf32>
    %12 = arith.truncf %11 : vector<2x32xf32> to vector<2x32xbf16>
    %c0_6 = arith.constant 0 : index
    %c0_7 = arith.constant 0 : index
    %13 = vector.load %arg2[%c0_6, %c0_7] : memref<32x4096xbf16, #tpu.memory_space<vmem>>, vector<32x4096xbf16>
    %cst_8 = arith.constant dense<0.000000e+00> : vector<2x4096xf32>
    %14 = tpu.matmul %12, %13, %cst_8 {dimension_numbers = #tpu.dot_dimension_numbers<[1], [0], [0], [1], [0, 0, 1, 1], [], []>} : vector<2x32xbf16>, vector<32x4096xbf16>, vector<2x4096xf32> -> vector<2x4096xf32>
    %c0_9 = arith.constant 0 : index
    %c0_10 = arith.constant 0 : index
    %15 = vector.load %arg3[%c0_9, %c0_10] : memref<1x4096xf32, #tpu.memory_space<vmem>>, vector<1x4096xf32>
    %16 = vector.broadcast %15 : vector<1x4096xf32> to vector<2x4096xf32>
    %17 = arith.addf %14, %16 : vector<2x4096xf32>
    %cst_11 = arith.constant 0.000000e+00 : f32
    %18 = vector.broadcast %cst_11 : f32 to vector<2x4096xf32>
    %19 = arith.maximumf %17, %18 : vector<2x4096xf32>
    %c0_12 = arith.constant 0 : index
    %c0_13 = arith.constant 0 : index
    %20 = vector.load %arg4[%c0_12, %c0_13] : memref<1x4096xf32, #tpu.memory_space<vmem>>, vector<1x4096xf32>
    %21 = vector.broadcast %20 : vector<1x4096xf32> to vector<2x4096xf32>
    %22 = arith.mulf %19, %21 : vector<2x4096xf32>
    %cst_14 = arith.constant dense<0.000000e+00> : vector<2xf32>
    %23 = vector.multi_reduction <add>, %22, %cst_14 [1] : vector<2x4096xf32> to vector<2xf32>
    %24 = vector.shape_cast %23 : vector<2xf32> to vector<2x1xf32>
    %c0_15 = arith.constant 0 : index
    %c0_16 = arith.constant 0 : index
    %25 = memref.load %arg5[%c0_15, %c0_16] : memref<1x1xf32, #tpu.memory_space<smem>>
    %26 = vector.broadcast %25 : f32 to vector<2x1xf32>
    %27 = arith.addf %24, %26 : vector<2x1xf32>
    %c0_17 = arith.constant 0 : index
    %c0_18 = arith.constant 0 : index
    %28 = vector.load %arg6[%c0_17, %c0_18] : memref<2x1xf32, #tpu.memory_space<vmem>>, vector<2x1xf32>
    tpu.vector_store %arg6[%c0_17, %c0_18], %27 {strides = array<i32>} : memref<2x1xf32, #tpu.memory_space<vmem>>, vector<2x1xf32>,
    return
  }
}

</mosaic_0001>

<llo_original>
// kernel: tpu_custom_call.1
$region0: #{tpu_custom_call.1}
  #allocation0 [shape = 'u32[]', space=smem, size = 0x4, offset = 0x4, fixed_abs, tag = 'smem constant byte address 0x4 - core index']
  #allocation1 [shape = 'u32[144,128]{1,0:T(1,128)}', space=vmem, size = 0x12000, scoped, tag = 'internal scratch']
  #allocation2 [shape = 'f32[1,1]{1,0:T(1,128)S(6)}', space=smem, size = 0x200, scoped, tag = 'scoped memory for tpu_custom_call.1']
  %s0 = inlined_call_operand.hbm [shape: f32[2,8,32], index: 0, kind: input, shape index: {}]
  %s1 = inlined_call_operand.vmem [shape: f32[2,8], index: 1, kind: input, shape index: {}]
  %s2 = inlined_call_operand.hbm [shape: bf16[32,4096], index: 2, kind: input, shape index: {}]
  %s3 = inlined_call_operand.hbm [shape: f32[1,4096], index: 3, kind: input, shape index: {}]
  %s4 = inlined_call_operand.hbm [shape: f32[1,4096], index: 4, kind: input, shape index: {}]
  %s5 = inlined_call_operand.<no memory space> [shape: f32[1,1], index: 5, kind: input, shape index: {}]
  %s6 = inlined_call_operand.vmem [shape: f32[2,1], index: 6, kind: output, shape index: {}]
  %s7 = sld [smem:[#allocation0]]
  $region50: #{tpu_custom_call.1} parent=0
    _
  %s9 = ssub.s32 1, %s7
  %s10 = scalar_select 0, %s9, %s7
  %11 = sst [smem:[#allocation2]] %s5
  $region1: #{tpu_custom_call.1} parent=0
    #allocation3 [shape = 'u8[8192]{0}', space=vmem, size = 0x2000, scoped, tag = 'input window, operand 0, single buffered']
    #allocation4 [shape = 's32[1]{0}', space=sflag, size = 0x4, scoped, tag = 'scoped memory for tpu_custom_call.1']
    #allocation5 [shape = 'u8[262144]{0}', space=vmem, size = 0x40000, scoped, tag = 'input window, operand 2, single buffered']
    #allocation6 [shape = 's32[1]{0}', space=sflag, size = 0x4, scoped, tag = 'scoped memory for tpu_custom_call.1']
    #allocation7 [shape = 'u8[16384]{0}', space=vmem, size = 0x4000, scoped, tag = 'input window, operand 3, single buffered']
    #allocation8 [shape = 'u8[16384]{0}', space=vmem, size = 0x4000, scoped, tag = 'input window, operand 4, single buffered']
    #allocation9 [shape = 's32[1]{0}', space=sflag, size = 0x4, scoped, tag = 'scoped memory for tpu_custom_call.1']
    %12 = vsyncpa [#allocation4], 0
    %13 = vsyncpa [#allocation6], 0
    %14 = vsyncpa [#allocation9], 0
    // Predicated region
    $region2: #{tpu_custom_call.1} parent=1 // pred_check
      _
    $region3: #{tpu_custom_call.1} parent=1 // pred_check_branch
      %16 = sbr.rel (0) target = $region5
    $region4: #{tpu_custom_call.1} parent=1 // pred_region
      %s18 = ssub.s32 256, 256
      %19 = vsyncadd [#allocation4], %s18
      %s20 = sshll.u32 [#allocation3], 4
      %s21 = int_to_ptr.vmem [resolvable:$true] %s20
      %26 = dma.hbm_to_vmem [thread:$0]  %s0, 256, %s21, [#allocation4], 128, 128, 8
    $region5: #{tpu_custom_call.1} parent=1 // pred_fallthru
      _
    // Predicated region
    $region6: #{tpu_custom_call.1} parent=1 // pred_check
      _
    $region7: #{tpu_custom_call.1} parent=1 // pred_check_branch
      %28 = sbr.rel (0) target = $region9
    $region8: #{tpu_custom_call.1} parent=1 // pred_region
      _
    $region9: #{tpu_custom_call.1} parent=1 // pred_fallthru
      _
    // Predicated region
    $region10: #{tpu_custom_call.1} parent=1 // pred_check
      _
    $region11: #{tpu_custom_call.1} parent=1 // pred_check_branch
      %30 = sbr.rel (0) target = $region13
    $region12: #{tpu_custom_call.1} parent=1 // pred_region
      %s32 = ssub.s32 8192, 8192
      %33 = vsyncadd [#allocation6], %s32
      %s34 = sshll.u32 [#allocation5], 4
      %s35 = int_to_ptr.vmem [resolvable:$true] %s34
      %40 = dma.hbm_to_vmem [thread:$0]  %s2, 8192, %s35, [#allocation6], 2048, 2048, 128
    $region13: #{tpu_custom_call.1} parent=1 // pred_fallthru
      _
    // Predicated region
    $region14: #{tpu_custom_call.1} parent=1 // pred_check
      _
    $region15: #{tpu_custom_call.1} parent=1 // pred_check_branch
      %42 = sbr.rel (0) target = $region17
    $region16: #{tpu_custom_call.1} parent=1 // pred_region
      %s44 = ssub.s32 512, 512
      %45 = vsyncadd [#allocation6], %s44
      %s47 = sshll.u32 [#allocation7], 4
      %s48 = int_to_ptr.vmem [resolvable:$true] %s47
      %50 = dma.hbm_to_vmem [thread:$0]  %s3, 512, %s48, [#allocation6]
    $region17: #{tpu_custom_call.1} parent=1 // pred_fallthru
      _
    // Predicated region
    $region18: #{tpu_custom_call.1} parent=1 // pred_check
      _
    $region19: #{tpu_custom_call.1} parent=1 // pred_check_branch
      %52 = sbr.rel (0) target = $region21
    $region20: #{tpu_custom_call.1} parent=1 // pred_region
      %s54 = ssub.s32 512, 512
      %55 = vsyncadd [#allocation9], %s54
      %s57 = sshll.u32 [#allocation8], 4
      %s58 = int_to_ptr.vmem [resolvable:$true] %s57
      %60 = dma.hbm_to_vmem [thread:$0]  %s4, 512, %s58, [#allocation9]
    $region21: #{tpu_custom_call.1} parent=1 // pred_fallthru
      _
    // Predicated region
    $region22: #{tpu_custom_call.1} parent=1 // pred_check
      _
    $region23: #{tpu_custom_call.1} parent=1 // pred_check_branch
      %62 = sbr.rel (0) target = $region25
    $region24: #{tpu_custom_call.1} parent=1 // pred_region
      _
    $region25: #{tpu_custom_call.1} parent=1 // pred_fallthru
      _
    // Predicated region
    $region26: #{tpu_custom_call.1} parent=1 // pred_check
      _
    $region27: #{tpu_custom_call.1} parent=1 // pred_check_branch
      %64 = sbr.rel (0) target = $region29
    $region28: #{tpu_custom_call.1} parent=1 // pred_region
      %65 = dma.done [#allocation4], 256
    $region29: #{tpu_custom_call.1} parent=1 // pred_fallthru
      _
    // Predicated region
    $region30: #{tpu_custom_call.1} parent=1 // pred_check
      _
    $region31: #{tpu_custom_call.1} parent=1 // pred_check_branch
      %67 = sbr.rel (0) target = $region33
    $region32: #{tpu_custom_call.1} parent=1 // pred_region
      %68 = dma.done [#allocation6], 8192
    $region33: #{tpu_custom_call.1} parent=1 // pred_fallthru
      _
    // Predicated region
    $region34: #{tpu_custom_call.1} parent=1 // pred_check
      _
    $region35: #{tpu_custom_call.1} parent=1 // pred_check_branch
      %70 = sbr.rel (0) target = $region37
    $region36: #{tpu_custom_call.1} parent=1 // pred_region
      %71 = dma.done [#allocation6], 512
    $region37: #{tpu_custom_call.1} parent=1 // pred_fallthru
      _
    // Predicated region
    $region38: #{tpu_custom_call.1} parent=1 // pred_check
      _
    $region39: #{tpu_custom_call.1} parent=1 // pred_check_branch
      %73 = sbr.rel (0) target = $region41
    $region40: #{tpu_custom_call.1} parent=1 // pred_region
      %74 = dma.done [#allocation9], 512
    $region41: #{tpu_custom_call.1} parent=1 // pred_fallthru
      _
    %v76 = vld [vmem:[#allocation3] sm:$0xff]
    %v77 = vld [vmem:[#allocation3 + $0x8] sm:$0xff]
    %v78 = vld [vmem:[%s1] sm:$0x3]
    %v79 = vlaneseq
    %v80 = vshrl.u32 %v79, 7
    %v81 = vsub.s32 0, %v80
    %v82 = vrot.slane %v78, %v81
    %84 = vbcast.lane.b32.xlu0 %v82, 256
    %v85 = vpop.permute.xlu0 %84
    %v86 = vlaneseq
    %v87 = vshrl.u32 %v86, 7
    %v88 = vsub.s32 1, %v87
    %v89 = vrot.slane %v78, %v88
    %91 = vbcast.lane.b32.xlu0 %v89, 256
    %v92 = vpop.permute.xlu0 %91
    %v93 = vmul.f32 %v76, %v85
    %v94 = vmul.f32 %v77, %v92
    %vm95 = vcmask 261120
    %v96 = vsel %vm95, %v93, 0.0
    %v97 = vrot.slane %v96, 4
    %v98 = vadd.f32 %v96, %v97
    %v99 = vrot.slane %v98, 2
    %v100 = vadd.f32 %v98, %v99
    %v101 = vrot.slane %v100, 1
    %v102 = vadd.f32 %v100, %v101
    %v103 = vsel %vm95, %v94, 0.0
    %v104 = vrot.slane %v103, 4
    %v105 = vadd.f32 %v103, %v104
    %v106 = vrot.slane %v105, 2
    %v107 = vadd.f32 %v105, %v106
    %v108 = vrot.slane %v107, 1
    %v109 = vadd.f32 %v107, %v108
    %vm110 = vcmask 58368
    %v111 = vsel %vm110, %v78, 0.0
    %112 = vadd.xlane.f32.xlu0 %v111
    %v113 = vpop.xlane.xlu0 %112
    %v114 = vmax.f32 %v113, 1e-09
    %v116 = vrot.slane %v114, 1
    %v119 = vrcp.pop %v114
    %v120 = vmul.f32 %v102, %v119
    %v121 = vrcp.pop %v116
    %v122 = vmul.f32 %v109, %v121
    %v123 = vpack.c.bf16 %v120, %v120
    %v124 = vpack.c.bf16 %v122, %v122
    %v125 = vld [vmem:[#allocation5] sm:$0xff]
    %v126 = vld [vmem:[#allocation5 + $0x8] sm:$0xff]
    %v127 = vld [vmem:[#allocation5 + $0x10] sm:$0xff]
    %v128 = vld [vmem:[#allocation5 + $0x18] sm:$0xff]
    %v129 = vld [vmem:[#allocation5 + $0x20] sm:$0xff]
    %v130 = vld [vmem:[#allocation5 + $0x28] sm:$0xff]
    %v131 = vld [vmem:[#allocation5 + $0x30] sm:$0xff]
    %v132 = vld [vmem:[#allocation5 + $0x38] sm:$0xff]
    %v133 = vld [vmem:[#allocation5 + $0x40] sm:$0xff]
    %v134 = vld [vmem:[#allocation5 + $0x48] sm:$0xff]
    %v135 = vld [vmem:[#allocation5 + $0x50] sm:$0xff]
    %v136 = vld [vmem:[#allocation5 + $0x58] sm:$0xff]
    %v137 = vld [vmem:[#allocation5 + $0x60] sm:$0xff]
    %v138 = vld [vmem:[#allocation5 + $0x68] sm:$0xff]
    %v139 = vld [vmem:[#allocation5 + $0x70] sm:$0xff]
    %v140 = vld [vmem:[#allocation5 + $0x78] sm:$0xff]
    %v141 = vld [vmem:[#allocation5 + $0x80] sm:$0xff]
    %v142 = vld [vmem:[#allocation5 + $0x88] sm:$0xff]
    %v143 = vld [vmem:[#allocation5 + $0x90] sm:$0xff]
    %v144 = vld [vmem:[#allocation5 + $0x98] sm:$0xff]
    %v145 = vld [vmem:[#allocation5 + $0xa0] sm:$0xff]
    %v146 = vld [vmem:[#allocation5 + $0xa8] sm:$0xff]
    %v147 = vld [vmem:[#allocation5 + $0xb0] sm:$0xff]
    %v148 = vld [vmem:[#allocation5 + $0xb8] sm:$0xff]
    %v149 = vld [vmem:[#allocation5 + $0xc0] sm:$0xff]
    %v150 = vld [vmem:[#allocation5 + $0xc8] sm:$0xff]
    %v151 = vld [vmem:[#allocation5 + $0xd0] sm:$0xff]
    %v152 = vld [vmem:[#allocation5 + $0xd8] sm:$0xff]
    %v153 = vld [vmem:[#allocation5 + $0xe0] sm:$0xff]
    %v154 = vld [vmem:[#allocation5 + $0xe8] sm:$0xff]
    %v155 = vld [vmem:[#allocation5 + $0xf0] sm:$0xff]
    %v156 = vld [vmem:[#allocation5 + $0xf8] sm:$0xff]
    %v157 = vld [vmem:[#allocation5 + $0x100] sm:$0xff]
    %v158 = vld [vmem:[#allocation5 + $0x108] sm:$0xff]
    %v159 = vld [vmem:[#allocation5 + $0x110] sm:$0xff]
    %v160 = vld [vmem:[#allocation5 + $0x118] sm:$0xff]
    %v161 = vld [vmem:[#allocation5 + $0x120] sm:$0xff]
    %v162 = vld [vmem:[#allocation5 + $0x128] sm:$0xff]
    %v163 = vld [vmem:[#allocation5 + $0x130] sm:$0xff]
    %v164 = vld [vmem:[#allocation5 + $0x138] sm:$0xff]
    %v165 = vld [vmem:[#allocation5 + $0x140] sm:$0xff]
    %v166 = vld [vmem:[#allocation5 + $0x148] sm:$0xff]
    %v167 = vld [vmem:[#allocation5 + $0x150] sm:$0xff]
    %v168 = vld [vmem:[#allocation5 + $0x158] sm:$0xff]
    %v169 = vld [vmem:[#allocation5 + $0x160] sm:$0xff]
    %v170 = vld [vmem:[#allocation5 + $0x168] sm:$0xff]
    %v171 = vld [vmem:[#allocation5 + $0x170] sm:$0xff]
    %v172 = vld [vmem:[#allocation5 + $0x178] sm:$0xff]
    %v173 = vld [vmem:[#allocation5 + $0x180] sm:$0xff]
    %v174 = vld [vmem:[#allocation5 + $0x188] sm:$0xff]
    %v175 = vld [vmem:[#allocation5 + $0x190] sm:$0xff]
    %v176 = vld [vmem:[#allocation5 + $0x198] sm:$0xff]
    %v177 = vld [vmem:[#allocation5 + $0x1a0] sm:$0xff]
    %v178 = vld [vmem:[#allocation5 + $0x1a8] sm:$0xff]
    %v179 = vld [vmem:[#allocation5 + $0x1b0] sm:$0xff]
    %v180 = vld [vmem:[#allocation5 + $0x1b8] sm:$0xff]
    %v181 = vld [vmem:[#allocation5 + $0x1c0] sm:$0xff]
    %v182 = vld [vmem:[#allocation5 + $0x1c8] sm:$0xff]
    %v183 = vld [vmem:[#allocation5 + $0x1d0] sm:$0xff]
    %v184 = vld [vmem:[#allocation5 + $0x1d8] sm:$0xff]
    %v185 = vld [vmem:[#allocation5 + $0x1e0] sm:$0xff]
    %v186 = vld [vmem:[#allocation5 + $0x1e8] sm:$0xff]
    %v187 = vld [vmem:[#allocation5 + $0x1f0] sm:$0xff]
    %v188 = vld [vmem:[#allocation5 + $0x1f8] sm:$0xff]
    %v189 = vld [vmem:[#allocation7] sm:$0xff]
    %v190 = vld [vmem:[#allocation7 + $0x8] sm:$0xff]
    %v191 = vld [vmem:[#allocation7 + $0x10] sm:$0xff]
    %v192 = vld [vmem:[#allocation7 + $0x18] sm:$0xff]
    %v197 = vlaneseq
    %v198 = vshrl.u32 %v197, 7
    %v199 = vsub.s32 0, %v198
    %v200 = vrot.slane %v189, %v199
    %v201 = vlaneseq
    %v202 = vshrl.u32 %v201, 7
    %v203 = vsub.s32 1, %v202
    %v204 = vrot.slane %v189, %v203
    %v205 = vlaneseq
    %v206 = vshrl.u32 %v205, 7
    %v207 = vsub.s32 2, %v206
    %v208 = vrot.slane %v189, %v207
    %v209 = vlaneseq
    %v210 = vshrl.u32 %v209, 7
    %v211 = vsub.s32 3, %v210
    %v212 = vrot.slane %v189, %v211
    %v213 = vlaneseq
    %v214 = vshrl.u32 %v213, 7
    %v215 = vsub.s32 4, %v214
    %v216 = vrot.slane %v189, %v215
    %v217 = vlaneseq
    %v218 = vshrl.u32 %v217, 7
    %v219 = vsub.s32 5, %v218
    %v220 = vrot.slane %v189, %v219
    %v221 = vlaneseq
    %v222 = vshrl.u32 %v221, 7
    %v223 = vsub.s32 6, %v222
    %v224 = vrot.slane %v189, %v223
    %v225 = vlaneseq
    %v226 = vshrl.u32 %v225, 7
    %v227 = vsub.s32 7, %v226
    %v228 = vrot.slane %v189, %v227
    %v229 = vlaneseq
    %v230 = vshrl.u32 %v229, 7
    %v231 = vsub.s32 0, %v230
    %v232 = vrot.slane %v190, %v231
    %v233 = vlaneseq
    %v234 = vshrl.u32 %v233, 7
    %v235 = vsub.s32 1, %v234
    %v236 = vrot.slane %v190, %v235
    %v237 = vlaneseq
    %v238 = vshrl.u32 %v237, 7
    %v239 = vsub.s32 2, %v238
    %v240 = vrot.slane %v190, %v239
    %v241 = vlaneseq
    %v242 = vshrl.u32 %v241, 7
    %v243 = vsub.s32 3, %v242
    %v244 = vrot.slane %v190, %v243
    %v245 = vlaneseq
    %v246 = vshrl.u32 %v245, 7
    %v247 = vsub.s32 4, %v246
    %v248 = vrot.slane %v190, %v247
    %v249 = vlaneseq
    %v250 = vshrl.u32 %v249, 7
    %v251 = vsub.s32 5, %v250
    %v252 = vrot.slane %v190, %v251
    %v253 = vlaneseq
    %v254 = vshrl.u32 %v253, 7
    %v255 = vsub.s32 6, %v254
    %v256 = vrot.slane %v190, %v255
    %v257 = vlaneseq
    %v258 = vshrl.u32 %v257, 7
    %v259 = vsub.s32 7, %v258
    %v260 = vrot.slane %v190, %v259
    %v261 = vlaneseq
    %v262 = vshrl.u32 %v261, 7
    %v263 = vsub.s32 0, %v262
    %v264 = vrot.slane %v191, %v263
    %v265 = vlaneseq
    %v266 = vshrl.u32 %v265, 7
    %v267 = vsub.s32 1, %v266
    %v268 = vrot.slane %v191, %v267
    %v269 = vlaneseq
    %v270 = vshrl.u32 %v269, 7
    %v271 = vsub.s32 2, %v270
    %v272 = vrot.slane %v191, %v271
    %v273 = vlaneseq
    %v274 = vshrl.u32 %v273, 7
    %v275 = vsub.s32 3, %v274
    %v276 = vrot.slane %v191, %v275
    %v277 = vlaneseq
    %v278 = vshrl.u32 %v277, 7
    %v279 = vsub.s32 4, %v278
    %v280 = vrot.slane %v191, %v279
    %v281 = vlaneseq
    %v282 = vshrl.u32 %v281, 7
    %v283 = vsub.s32 5, %v282
    %v284 = vrot.slane %v191, %v283
    %v285 = vlaneseq
    %v286 = vshrl.u32 %v285, 7
    %v287 = vsub.s32 6, %v286
    %v288 = vrot.slane %v191, %v287
    %v289 = vlaneseq
    %v290 = vshrl.u32 %v289, 7
    %v291 = vsub.s32 7, %v290
    %v292 = vrot.slane %v191, %v291
    %v293 = vlaneseq
    %v294 = vshrl.u32 %v293, 7
    %v295 = vsub.s32 0, %v294
    %v296 = vrot.slane %v192, %v295
    %v297 = vlaneseq
    %v298 = vshrl.u32 %v297, 7
    %v299 = vsub.s32 1, %v298
    %v300 = vrot.slane %v192, %v299
    %v301 = vlaneseq
    %v302 = vshrl.u32 %v301, 7
    %v303 = vsub.s32 2, %v302
    %v304 = vrot.slane %v192, %v303
    %v305 = vlaneseq
    %v306 = vshrl.u32 %v305, 7
    %v307 = vsub.s32 3, %v306
    %v308 = vrot.slane %v192, %v307
    %v309 = vlaneseq
    %v310 = vshrl.u32 %v309, 7
    %v311 = vsub.s32 4, %v310
    %v312 = vrot.slane %v192, %v311
    %v313 = vlaneseq
    %v314 = vshrl.u32 %v313, 7
    %v315 = vsub.s32 5, %v314
    %v316 = vrot.slane %v192, %v315
    %v317 = vlaneseq
    %v318 = vshrl.u32 %v317, 7
    %v319 = vsub.s32 6, %v318
    %v320 = vrot.slane %v192, %v319
    %v321 = vlaneseq
    %v322 = vshrl.u32 %v321, 7
    %v323 = vsub.s32 7, %v322
    %v324 = vrot.slane %v192, %v323
    %v359 = vunpack.c.l.b16 %v123
    %v360 = vunpack.c.l.b16 %v124
    %v361 = vrot.slane %v360, 7
    %vm362 = vcmask 1041409
    %v363 = vsel %vm362, %v361, %v359
    %v364 = vpack.c.b16 %v363, %v363
    %v429 = vunpack.c.l.b16 %v125
    %v430 = vunpack.c.h.b16 %v125
    %v431 = vunpack.c.l.b16 %v126
    %v432 = vunpack.c.h.b16 %v126
    %v433 = vunpack.c.l.b16 %v127
    %v434 = vunpack.c.h.b16 %v127
    %v435 = vunpack.c.l.b16 %v128
    %v436 = vunpack.c.h.b16 %v128
    %v437 = vunpack.c.l.b16 %v129
    %v438 = vunpack.c.h.b16 %v129
    %v439 = vunpack.c.l.b16 %v130
    %v440 = vunpack.c.h.b16 %v130
    %v441 = vunpack.c.l.b16 %v131
    %v442 = vunpack.c.h.b16 %v131
    %v443 = vunpack.c.l.b16 %v132
    %v444 = vunpack.c.h.b16 %v132
    %v445 = vunpack.c.l.b16 %v133
    %v446 = vunpack.c.h.b16 %v133
    %v447 = vunpack.c.l.b16 %v134
    %v448 = vunpack.c.h.b16 %v134
    %v449 = vunpack.c.l.b16 %v135
    %v450 = vunpack.c.h.b16 %v135
    %v451 = vunpack.c.l.b16 %v136
    %v452 = vunpack.c.h.b16 %v136
    %v453 = vunpack.c.l.b16 %v137
    %v454 = vunpack.c.h.b16 %v137
    %v455 = vunpack.c.l.b16 %v138
    %v456 = vunpack.c.h.b16 %v138
    %v457 = vunpack.c.l.b16 %v139
    %v458 = vunpack.c.h.b16 %v139
    %v459 = vunpack.c.l.b16 %v140
    %v460 = vunpack.c.h.b16 %v140
    %v461 = vunpack.c.l.b16 %v141
    %v462 = vunpack.c.h.b16 %v141
    %v463 = vunpack.c.l.b16 %v142
    %v464 = vunpack.c.h.b16 %v142
    %v465 = vunpack.c.l.b16 %v143
    %v466 = vunpack.c.h.b16 %v143
    %v467 = vunpack.c.l.b16 %v144
    %v468 = vunpack.c.h.b16 %v144
    %v469 = vunpack.c.l.b16 %v145
    %v470 = vunpack.c.h.b16 %v145
    %v471 = vunpack.c.l.b16 %v146
    %v472 = vunpack.c.h.b16 %v146
    %v473 = vunpack.c.l.b16 %v147
    %v474 = vunpack.c.h.b16 %v147
    %v475 = vunpack.c.l.b16 %v148
    %v476 = vunpack.c.h.b16 %v148
    %v477 = vunpack.c.l.b16 %v149
    %v478 = vunpack.c.h.b16 %v149
    %v479 = vunpack.c.l.b16 %v150
    %v480 = vunpack.c.h.b16 %v150
    %v481 = vunpack.c.l.b16 %v151
    %v482 = vunpack.c.h.b16 %v151
    %v483 = vunpack.c.l.b16 %v152
    %v484 = vunpack.c.h.b16 %v152
    %v485 = vunpack.c.l.b16 %v153
    %v486 = vunpack.c.h.b16 %v153
    %v487 = vunpack.c.l.b16 %v154
    %v488 = vunpack.c.h.b16 %v154
    %v489 = vunpack.c.l.b16 %v155
    %v490 = vunpack.c.h.b16 %v155
    %v491 = vunpack.c.l.b16 %v156
    %v492 = vunpack.c.h.b16 %v156
    %v493 = vunpack.c.l.b16 %v157
    %v494 = vunpack.c.h.b16 %v157
    %v495 = vunpack.c.l.b16 %v158
    %v496 = vunpack.c.h.b16 %v158
    %v497 = vunpack.c.l.b16 %v159
    %v498 = vunpack.c.h.b16 %v159
    %v499 = vunpack.c.l.b16 %v160
    %v500 = vunpack.c.h.b16 %v160
    %v501 = vunpack.c.l.b16 %v161
    %v502 = vunpack.c.h.b16 %v161
    %v503 = vunpack.c.l.b16 %v162
    %v504 = vunpack.c.h.b16 %v162
    %v505 = vunpack.c.l.b16 %v163
    %v506 = vunpack.c.h.b16 %v163
    %v507 = vunpack.c.l.b16 %v164
    %v508 = vunpack.c.h.b16 %v164
    %v509 = vunpack.c.l.b16 %v165
    %v510 = vunpack.c.h.b16 %v165
    %v511 = vunpack.c.l.b16 %v166
    %v512 = vunpack.c.h.b16 %v166
    %v513 = vunpack.c.l.b16 %v167
    %v514 = vunpack.c.h.b16 %v167
    %v515 = vunpack.c.l.b16 %v168
    %v516 = vunpack.c.h.b16 %v168
    %v517 = vunpack.c.l.b16 %v169
    %v518 = vunpack.c.h.b16 %v169
    %v519 = vunpack.c.l.b16 %v170
    %v520 = vunpack.c.h.b16 %v170
    %v521 = vunpack.c.l.b16 %v171
    %v522 = vunpack.c.h.b16 %v171
    %v523 = vunpack.c.l.b16 %v172
    %v524 = vunpack.c.h.b16 %v172
    %v525 = vunpack.c.l.b16 %v173
    %v526 = vunpack.c.h.b16 %v173
    %v527 = vunpack.c.l.b16 %v174
    %v528 = vunpack.c.h.b16 %v174
    %v529 = vunpack.c.l.b16 %v175
    %v530 = vunpack.c.h.b16 %v175
    %v531 = vunpack.c.l.b16 %v176
    %v532 = vunpack.c.h.b16 %v176
    %v533 = vunpack.c.l.b16 %v177
    %v534 = vunpack.c.h.b16 %v177
    %v535 = vunpack.c.l.b16 %v178
    %v536 = vunpack.c.h.b16 %v178
    %v537 = vunpack.c.l.b16 %v179
    %v538 = vunpack.c.h.b16 %v179
    %v539 = vunpack.c.l.b16 %v180
    %v540 = vunpack.c.h.b16 %v180
    %v541 = vunpack.c.l.b16 %v181
    %v542 = vunpack.c.h.b16 %v181
    %v543 = vunpack.c.l.b16 %v182
    %v544 = vunpack.c.h.b16 %v182
    %v545 = vunpack.c.l.b16 %v183
    %v546 = vunpack.c.h.b16 %v183
    %v547 = vunpack.c.l.b16 %v184
    %v548 = vunpack.c.h.b16 %v184
    %v549 = vunpack.c.l.b16 %v185
    %v550 = vunpack.c.h.b16 %v185
    %v551 = vunpack.c.l.b16 %v186
    %v552 = vunpack.c.h.b16 %v186
    %v553 = vunpack.c.l.b16 %v187
    %v554 = vunpack.c.h.b16 %v187
    %v555 = vunpack.c.l.b16 %v188
    %v556 = vunpack.c.h.b16 %v188
    %v557 = vpack.c.b16 %v461, %v429
    %v558 = vpack.c.b16 %v462, %v430
    %v559 = vpack.c.b16 %v463, %v431
    %v560 = vpack.c.b16 %v464, %v432
    %v561 = vpack.c.b16 %v465, %v433
    %v562 = vpack.c.b16 %v466, %v434
    %v563 = vpack.c.b16 %v467, %v435
    %v564 = vpack.c.b16 %v468, %v436
    %v565 = vpack.c.b16 %v469, %v437
    %v566 = vpack.c.b16 %v470, %v438
    %v567 = vpack.c.b16 %v471, %v439
    %v568 = vpack.c.b16 %v472, %v440
    %v569 = vpack.c.b16 %v473, %v441
    %v570 = vpack.c.b16 %v474, %v442
    %v571 = vpack.c.b16 %v475, %v443
    %v572 = vpack.c.b16 %v476, %v444
    %v573 = vpack.c.b16 %v477, %v445
    %v574 = vpack.c.b16 %v478, %v446
    %v575 = vpack.c.b16 %v479, %v447
    %v576 = vpack.c.b16 %v480, %v448
    %v577 = vpack.c.b16 %v481, %v449
    %v578 = vpack.c.b16 %v482, %v450
    %v579 = vpack.c.b16 %v483, %v451
    %v580 = vpack.c.b16 %v484, %v452
    %v581 = vpack.c.b16 %v485, %v453
    %v582 = vpack.c.b16 %v486, %v454
    %v583 = vpack.c.b16 %v487, %v455
    %v584 = vpack.c.b16 %v488, %v456
    %v585 = vpack.c.b16 %v489, %v457
    %v586 = vpack.c.b16 %v490, %v458
    %v587 = vpack.c.b16 %v491, %v459
    %v588 = vpack.c.b16 %v492, %v460
    %v589 = vpack.c.b16 %v525, %v493
    %v590 = vpack.c.b16 %v526, %v494
    %v591 = vpack.c.b16 %v527, %v495
    %v592 = vpack.c.b16 %v528, %v496
    %v593 = vpack.c.b16 %v529, %v497
    %v594 = vpack.c.b16 %v530, %v498
    %v595 = vpack.c.b16 %v531, %v499
    %v596 = vpack.c.b16 %v532, %v500
    %v597 = vpack.c.b16 %v533, %v501
    %v598 = vpack.c.b16 %v534, %v502
    %v599 = vpack.c.b16 %v535, %v503
    %v600 = vpack.c.b16 %v536, %v504
    %v601 = vpack.c.b16 %v537, %v505
    %v602 = vpack.c.b16 %v538, %v506
    %v603 = vpack.c.b16 %v539, %v507
    %v604 = vpack.c.b16 %v540, %v508
    %v605 = vpack.c.b16 %v541, %v509
    %v606 = vpack.c.b16 %v542, %v510
    %v607 = vpack.c.b16 %v543, %v511
    %v608 = vpack.c.b16 %v544, %v512
    %v609 = vpack.c.b16 %v545, %v513
    %v610 = vpack.c.b16 %v546, %v514
    %v611 = vpack.c.b16 %v547, %v515
    %v612 = vpack.c.b16 %v548, %v516
    %v613 = vpack.c.b16 %v549, %v517
    %v614 = vpack.c.b16 %v550, %v518
    %v615 = vpack.c.b16 %v551, %v519
    %v616 = vpack.c.b16 %v552, %v520
    %v617 = vpack.c.b16 %v553, %v521
    %v618 = vpack.c.b16 %v554, %v522
    %v619 = vpack.c.b16 %v555, %v523
    %v620 = vpack.c.b16 %v556, %v524
    %v686 = vsel %vm95, %v364, 0
    %688 = vmatprep.subr.bf16.mxu0 0
    %689 = vmatpush1.bf16.msra.mxu0 0
    %690 = vmatprep.subr.bf16.mxu0 0
    %691 = vmatpush1.bf16.msra.mxu0 0
    %692 = vmatprep.subr.bf16.mxu0 0
    %693 = vmatpush1.bf16.msra.mxu0 0
    %694 = vmatprep.subr.bf16.mxu0 0
    %695 = vmatpush1.bf16.msra.mxu0 0
    %696 = vmatprep.subr.bf16.mxu0 0
    %697 = vmatpush1.bf16.msra.mxu0 0
    %698 = vmatprep.subr.bf16.mxu0 0
    %699 = vmatpush1.bf16.msra.mxu0 0
    %700 = vmatprep.subr.bf16.mxu0 %v590
    %701 = vmatpush1.bf16.msra.mxu0 %v589
    %702 = vmatprep.subr.bf16.mxu0 %v558
    %703 = vmatpush1.bf16.msra.mxu0 %v557
    %704 = vmatprep.subr.bf16.mxu0 0
    %705 = vmatpush2.bf16.msra.mxu0 0
    %706 = vmatprep.subr.bf16.mxu0 0
    %707 = vmatpush2.bf16.msra.mxu0 0
    %708 = vmatprep.subr.bf16.mxu0 0
    %709 = vmatpush2.bf16.msra.mxu0 0
    %710 = vmatprep.subr.bf16.mxu0 0
    %711 = vmatpush2.bf16.msra.mxu0 0
    %712 = vmatprep.subr.bf16.mxu0 0
    %713 = vmatpush2.bf16.msra.mxu0 0
    %714 = vmatprep.subr.bf16.mxu0 0
    %715 = vmatpush2.bf16.msra.mxu0 0
    %716 = vmatprep.subr.bf16.mxu0 0
    %717 = vmatpush2.bf16.msra.mxu0 0
    %718 = vmatprep.subr.bf16.mxu0 0
    %719 = vmatpush2.bf16.msra.mxu0 0
    %720 = vmatprep.mubr.bf16.mxu0 0
    %721 = vmatmul.mubr.bf16.gmra.mxu0 %v686
    %v722 = vpop.f32.mrf.mxu0
    %v723 = vadd.f32 %v200, %v722
    %v724 = vpop.f32.mrf.mxu0
    %v725 = vadd.f32 %v204, %v724
    %v726 = vpop.f32.mrf.mxu0
    %v727 = vpop.f32.mrf.mxu0
    %728 = vdwg.mxu0
    %729 = vmatprep.subr.bf16.mxu0 0
    %730 = vmatpush1.bf16.msra.mxu0 0
    %731 = vmatprep.subr.bf16.mxu0 0
    %732 = vmatpush1.bf16.msra.mxu0 0
    %733 = vmatprep.subr.bf16.mxu0 0
    %734 = vmatpush1.bf16.msra.mxu0 0
    %735 = vmatprep.subr.bf16.mxu0 0
    %736 = vmatpush1.bf16.msra.mxu0 0
    %737 = vmatprep.subr.bf16.mxu0 0
    %738 = vmatpush1.bf16.msra.mxu0 0
    %739 = vmatprep.subr.bf16.mxu0 0
    %740 = vmatpush1.bf16.msra.mxu0 0
    %741 = vmatprep.subr.bf16.mxu0 %v592
    %742 = vmatpush1.bf16.msra.mxu0 %v591
    %743 = vmatprep.subr.bf16.mxu0 %v560
    %744 = vmatpush1.bf16.msra.mxu0 %v559
    %745 = vmatprep.subr.bf16.mxu0 0
    %746 = vmatpush2.bf16.msra.mxu0 0
    %747 = vmatprep.subr.bf16.mxu0 0
    %748 = vmatpush2.bf16.msra.mxu0 0
    %749 = vmatprep.subr.bf16.mxu0 0
    %750 = vmatpush2.bf16.msra.mxu0 0
    %751 = vmatprep.subr.bf16.mxu0 0
    %752 = vmatpush2.bf16.msra.mxu0 0
    %753 = vmatprep.subr.bf16.mxu0 0
    %754 = vmatpush2.bf16.msra.mxu0 0
    %755 = vmatprep.subr.bf16.mxu0 0
    %756 = vmatpush2.bf16.msra.mxu0 0
    %757 = vmatprep.subr.bf16.mxu0 0
    %758 = vmatpush2.bf16.msra.mxu0 0
    %759 = vmatprep.subr.bf16.mxu0 0
    %760 = vmatpush2.bf16.msra.mxu0 0
    %761 = vmatprep.mubr.bf16.mxu0 0
    %762 = vmatmul.mubr.bf16.gmra.mxu0 %v686
    %v763 = vpop.f32.mrf.mxu0
    %v764 = vadd.f32 %v208, %v763
    %v765 = vpop.f32.mrf.mxu0
    %v766 = vadd.f32 %v212, %v765
    %v767 = vpop.f32.mrf.mxu0
    %v768 = vpop.f32.mrf.mxu0
    %769 = vdwg.mxu0
    %770 = vmatprep.subr.bf16.mxu0 0
    %771 = vmatpush1.bf16.msra.mxu0 0
    %772 = vmatprep.subr.bf16.mxu0 0
    %773 = vmatpush1.bf16.msra.mxu0 0
    %774 = vmatprep.subr.bf16.mxu0 0
    %775 = vmatpush1.bf16.msra.mxu0 0
    %776 = vmatprep.subr.bf16.mxu0 0
    %777 = vmatpush1.bf16.msra.mxu0 0
    %778 = vmatprep.subr.bf16.mxu0 0
    %779 = vmatpush1.bf16.msra.mxu0 0
    %780 = vmatprep.subr.bf16.mxu0 0
    %781 = vmatpush1.bf16.msra.mxu0 0
    %782 = vmatprep.subr.bf16.mxu0 %v594
    %783 = vmatpush1.bf16.msra.mxu0 %v593
    %784 = vmatprep.subr.bf16.mxu0 %v562
    %785 = vmatpush1.bf16.msra.mxu0 %v561
    %786 = vmatprep.subr.bf16.mxu0 0
    %787 = vmatpush2.bf16.msra.mxu0 0
    %788 = vmatprep.subr.bf16.mxu0 0
    %789 = vmatpush2.bf16.msra.mxu0 0
    %790 = vmatprep.subr.bf16.mxu0 0
    %791 = vmatpush2.bf16.msra.mxu0 0
    %792 = vmatprep.subr.bf16.mxu0 0
    %793 = vmatpush2.bf16.msra.mxu0 0
    %794 = vmatprep.subr.bf16.mxu0 0
    %795 = vmatpush2.bf16.msra.mxu0 0
    %796 = vmatprep.subr.bf16.mxu0 0
    %797 = vmatpush2.bf16.msra.mxu0 0
    %798 = vmatprep.subr.bf16.mxu0 0
    %799 = vmatpush2.bf16.msra.mxu0 0
    %800 = vmatprep.subr.bf16.mxu0 0
    %801 = vmatpush2.bf16.msra.mxu0 0
    %802 = vmatprep.mubr.bf16.mxu0 0
    %803 = vmatmul.mubr.bf16.gmra.mxu0 %v686
    %v804 = vpop.f32.mrf.mxu0
    %v805 = vadd.f32 %v216, %v804
    %v806 = vpop.f32.mrf.mxu0
    %v807 = vadd.f32 %v220, %v806
    %v808 = vpop.f32.mrf.mxu0
    %v809 = vpop.f32.mrf.mxu0
    %810 = vdwg.mxu0
    %811 = vmatprep.subr.bf16.mxu0 0
    %812 = vmatpush1.bf16.msra.mxu0 0
    %813 = vmatprep.subr.bf16.mxu0 0
    %814 = vmatpush1.bf16.msra.mxu0 0
    %815 = vmatprep.subr.bf16.mxu0 0
    %816 = vmatpush1.bf16.msra.mxu0 0
    %817 = vmatprep.subr.bf16.mxu0 0
    %818 = vmatpush1.bf16.msra.mxu0 0
    %819 = vmatprep.subr.bf16.mxu0 0
    %820 = vmatpush1.bf16.msra.mxu0 0
    %821 = vmatprep.subr.bf16.mxu0 0
    %822 = vmatpush1.bf16.msra.mxu0 0
    %823 = vmatprep.subr.bf16.mxu0 %v596
    %824 = vmatpush1.bf16.msra.mxu0 %v595
    %825 = vmatprep.subr.bf16.mxu0 %v564
    %826 = vmatpush1.bf16.msra.mxu0 %v563
    %827 = vmatprep.subr.bf16.mxu0 0
    %828 = vmatpush2.bf16.msra.mxu0 0
    %829 = vmatprep.subr.bf16.mxu0 0
    %830 = vmatpush2.bf16.msra.mxu0 0
    %831 = vmatprep.subr.bf16.mxu0 0
    %832 = vmatpush2.bf16.msra.mxu0 0
    %833 = vmatprep.subr.bf16.mxu0 0
    %834 = vmatpush2.bf16.msra.mxu0 0
    %835 = vmatprep.subr.bf16.mxu0 0
    %836 = vmatpush2.bf16.msra.mxu0 0
    %837 = vmatprep.subr.bf16.mxu0 0
    %838 = vmatpush2.bf16.msra.mxu0 0
    %839 = vmatprep.subr.bf16.mxu0 0
    %840 = vmatpush2.bf16.msra.mxu0 0
    %841 = vmatprep.subr.bf16.mxu0 0
    %842 = vmatpush2.bf16.msra.mxu0 0
    %843 = vmatprep.mubr.bf16.mxu0 0
    %844 = vmatmul.mubr.bf16.gmra.mxu0 %v686
    %v845 = vpop.f32.mrf.mxu0
    %v846 = vadd.f32 %v224, %v845
    %v847 = vpop.f32.mrf.mxu0
    %v848 = vadd.f32 %v228, %v847
    %v849 = vpop.f32.mrf.mxu0
    %v850 = vpop.f32.mrf.mxu0
    %851 = vdwg.mxu0
    %852 = vmatprep.subr.bf16.mxu0 0
    %853 = vmatpush1.bf16.msra.mxu0 0
    %854 = vmatprep.subr.bf16.mxu0 0
    %855 = vmatpush1.bf16.msra.mxu0 0
    %856 = vmatprep.subr.bf16.mxu0 0
    %857 = vmatpush1.bf16.msra.mxu0 0
    %858 = vmatprep.subr.bf16.mxu0 0
    %859 = vmatpush1.bf16.msra.mxu0 0
    %860 = vmatprep.subr.bf16.mxu0 0
    %861 = vmatpush1.bf16.msra.mxu0 0
    %862 = vmatprep.subr.bf16.mxu0 0
    %863 = vmatpush1.bf16.msra.mxu0 0
    %864 = vmatprep.subr.bf16.mxu0 %v598
    %865 = vmatpush1.bf16.msra.mxu0 %v597
    %866 = vmatprep.subr.bf16.mxu0 %v566
    %867 = vmatpush1.bf16.msra.mxu0 %v565
    %868 = vmatprep.subr.bf16.mxu0 0
    %869 = vmatpush2.bf16.msra.mxu0 0
    %870 = vmatprep.subr.bf16.mxu0 0
    %871 = vmatpush2.bf16.msra.mxu0 0
    %872 = vmatprep.subr.bf16.mxu0 0
    %873 = vmatpush2.bf16.msra.mxu0 0
    %874 = vmatprep.subr.bf16.mxu0 0
    %875 = vmatpush2.bf16.msra.mxu0 0
    %876 = vmatprep.subr.bf16.mxu0 0
    %877 = vmatpush2.bf16.msra.mxu0 0
    %878 = vmatprep.subr.bf16.mxu0 0
    %879 = vmatpush2.bf16.msra.mxu0 0
    %880 = vmatprep.subr.bf16.mxu0 0
    %881 = vmatpush2.bf16.msra.mxu0 0
    %882 = vmatprep.subr.bf16.mxu0 0
    %883 = vmatpush2.bf16.msra.mxu0 0
    %884 = vmatprep.mubr.bf16.mxu0 0
    %885 = vmatmul.mubr.bf16.gmra.mxu0 %v686
    %v886 = vpop.f32.mrf.mxu0
    %v887 = vadd.f32 %v232, %v886
    %v888 = vpop.f32.mrf.mxu0
    %v889 = vadd.f32 %v236, %v888
    %v890 = vpop.f32.mrf.mxu0
    %v891 = vpop.f32.mrf.mxu0
    %892 = vdwg.mxu0
    %893 = vmatprep.subr.bf16.mxu0 0
    %894 = vmatpush1.bf16.msra.mxu0 0
    %895 = vmatprep.subr.bf16.mxu0 0
    %896 = vmatpush1.bf16.msra.mxu0 0
    %897 = vmatprep.subr.bf16.mxu0 0
    %898 = vmatpush1.bf16.msra.mxu0 0
    %899 = vmatprep.subr.bf16.mxu0 0
    %900 = vmatpush1.bf16.msra.mxu0 0
    %901 = vmatprep.subr.bf16.mxu0 0
    %902 = vmatpush1.bf16.msra.mxu0 0
    %903 = vmatprep.subr.bf16.mxu0 0
    %904 = vmatpush1.bf16.msra.mxu0 0
    %905 = vmatprep.subr.bf16.mxu0 %v600
    %906 = vmatpush1.bf16.msra.mxu0 %v599
    %907 = vmatprep.subr.bf16.mxu0 %v568
    %908 = vmatpush1.bf16.msra.mxu0 %v567
    %909 = vmatprep.subr.bf16.mxu0 0
    %910 = vmatpush2.bf16.msra.mxu0 0
    %911 = vmatprep.subr.bf16.mxu0 0
    %912 = vmatpush2.bf16.msra.mxu0 0
    %913 = vmatprep.subr.bf16.mxu0 0
    %914 = vmatpush2.bf16.msra.mxu0 0
    %915 = vmatprep.subr.bf16.mxu0 0
    %916 = vmatpush2.bf16.msra.mxu0 0
    %917 = vmatprep.subr.bf16.mxu0 0
    %918 = vmatpush2.bf16.msra.mxu0 0
    %919 = vmatprep.subr.bf16.mxu0 0
    %920 = vmatpush2.bf16.msra.mxu0 0
    %921 = vmatprep.subr.bf16.mxu0 0
    %922 = vmatpush2.bf16.msra.mxu0 0
    %923 = vmatprep.subr.bf16.mxu0 0
    %924 = vmatpush2.bf16.msra.mxu0 0
    %925 = vmatprep.mubr.bf16.mxu0 0
    %926 = vmatmul.mubr.bf16.gmra.mxu0 %v686
    %v927 = vpop.f32.mrf.mxu0
    %v928 = vadd.f32 %v240, %v927
    %v929 = vpop.f32.mrf.mxu0
    %v930 = vadd.f32 %v244, %v929
    %v931 = vpop.f32.mrf.mxu0
    %v932 = vpop.f32.mrf.mxu0
    %933 = vdwg.mxu0
    %934 = vmatprep.subr.bf16.mxu0 0
    %935 = vmatpush1.bf16.msra.mxu0 0
    %936 = vmatprep.subr.bf16.mxu0 0
    %937 = vmatpush1.bf16.msra.mxu0 0
    %938 = vmatprep.subr.bf16.mxu0 0
    %939 = vmatpush1.bf16.msra.mxu0 0
    %940 = vmatprep.subr.bf16.mxu0 0
    %941 = vmatpush1.bf16.msra.mxu0 0
    %942 = vmatprep.subr.bf16.mxu0 0
    %943 = vmatpush1.bf16.msra.mxu0 0
    %944 = vmatprep.subr.bf16.mxu0 0
    %945 = vmatpush1.bf16.msra.mxu0 0
    %946 = vmatprep.subr.bf16.mxu0 %v602
    %947 = vmatpush1.bf16.msra.mxu0 %v601
    %948 = vmatprep.subr.bf16.mxu0 %v570
    %949 = vmatpush1.bf16.msra.mxu0 %v569
    %950 = vmatprep.subr.bf16.mxu0 0
    %951 = vmatpush2.bf16.msra.mxu0 0
    %952 = vmatprep.subr.bf16.mxu0 0
    %953 = vmatpush2.bf16.msra.mxu0 0
    %954 = vmatprep.subr.bf16.mxu0 0
    %955 = vmatpush2.bf16.msra.mxu0 0
    %956 = vmatprep.subr.bf16.mxu0 0
    %957 = vmatpush2.bf16.msra.mxu0 0
    %958 = vmatprep.subr.bf16.mxu0 0
    %959 = vmatpush2.bf16.msra.mxu0 0
    %960 = vmatprep.subr.bf16.mxu0 0
    %961 = vmatpush2.bf16.msra.mxu0 0
    %962 = vmatprep.subr.bf16.mxu0 0
    %963 = vmatpush2.bf16.msra.mxu0 0
    %964 = vmatprep.subr.bf16.mxu0 0
    %965 = vmatpush2.bf16.msra.mxu0 0
    %966 = vmatprep.mubr.bf16.mxu0 0
    %967 = vmatmul.mubr.bf16.gmra.mxu0 %v686
    %v968 = vpop.f32.mrf.mxu0
    %v969 = vadd.f32 %v248, %v968
    %v970 = vpop.f32.mrf.mxu0
    %v971 = vadd.f32 %v252, %v970
    %v972 = vpop.f32.mrf.mxu0
    %v973 = vpop.f32.mrf.mxu0
    %974 = vdwg.mxu0
    %975 = vmatprep.subr.bf16.mxu0 0
    %976 = vmatpush1.bf16.msra.mxu0 0
    %977 = vmatprep.subr.bf16.mxu0 0
    %978 = vmatpush1.bf16.msra.mxu0 0
    %979 = vmatprep.subr.bf16.mxu0 0
    %980 = vmatpush1.bf16.msra.mxu0 0
    %981 = vmatprep.subr.bf16.mxu0 0
    %982 = vmatpush1.bf16.msra.mxu0 0
    %983 = vmatprep.subr.bf16.mxu0 0
    %984 = vmatpush1.bf16.msra.mxu0 0
    %985 = vmatprep.subr.bf16.mxu0 0
    %986 = vmatpush1.bf16.msra.mxu0 0
    %987 = vmatprep.subr.bf16.mxu0 %v604
    %988 = vmatpush1.bf16.msra.mxu0 %v603
    %989 = vmatprep.subr.bf16.mxu0 %v572
    %990 = vmatpush1.bf16.msra.mxu0 %v571
    %991 = vmatprep.subr.bf16.mxu0 0
    %992 = vmatpush2.bf16.msra.mxu0 0
    %993 = vmatprep.subr.bf16.mxu0 0
    %994 = vmatpush2.bf16.msra.mxu0 0
    %995 = vmatprep.subr.bf16.mxu0 0
    %996 = vmatpush2.bf16.msra.mxu0 0
    %997 = vmatprep.subr.bf16.mxu0 0
    %998 = vmatpush2.bf16.msra.mxu0 0
    %999 = vmatprep.subr.bf16.mxu0 0
    %1000 = vmatpush2.bf16.msra.mxu0 0
    %1001 = vmatprep.subr.bf16.mxu0 0
    %1002 = vmatpush2.bf16.msra.mxu0 0
    %1003 = vmatprep.subr.bf16.mxu0 0
    %1004 = vmatpush2.bf16.msra.mxu0 0
    %1005 = vmatprep.subr.bf16.mxu0 0
    %1006 = vmatpush2.bf16.msra.mxu0 0
    %1007 = vmatprep.mubr.bf16.mxu0 0
    %1008 = vmatmul.mubr.bf16.gmra.mxu0 %v686
    %v1009 = vpop.f32.mrf.mxu0
    %v1010 = vadd.f32 %v256, %v1009
    %v1011 = vpop.f32.mrf.mxu0
    %v1012 = vadd.f32 %v260, %v1011
    %v1013 = vpop.f32.mrf.mxu0
    %v1014 = vpop.f32.mrf.mxu0
    %1015 = vdwg.mxu0
    %1016 = vmatprep.subr.bf16.mxu0 0
    %1017 = vmatpush1.bf16.msra.mxu0 0
    %1018 = vmatprep.subr.bf16.mxu0 0
    %1019 = vmatpush1.bf16.msra.mxu0 0
    %1020 = vmatprep.subr.bf16.mxu0 0
    %1021 = vmatpush1.bf16.msra.mxu0 0
    %1022 = vmatprep.subr.bf16.mxu0 0
    %1023 = vmatpush1.bf16.msra.mxu0 0
    %1024 = vmatprep.subr.bf16.mxu0 0
    %1025 = vmatpush1.bf16.msra.mxu0 0
    %1026 = vmatprep.subr.bf16.mxu0 0
    %1027 = vmatpush1.bf16.msra.mxu0 0
    %1028 = vmatprep.subr.bf16.mxu0 %v606
    %1029 = vmatpush1.bf16.msra.mxu0 %v605
    %1030 = vmatprep.subr.bf16.mxu0 %v574
    %1031 = vmatpush1.bf16.msra.mxu0 %v573
    %1032 = vmatprep.subr.bf16.mxu0 0
    %1033 = vmatpush2.bf16.msra.mxu0 0
    %1034 = vmatprep.subr.bf16.mxu0 0
    %1035 = vmatpush2.bf16.msra.mxu0 0
    %1036 = vmatprep.subr.bf16.mxu0 0
    %1037 = vmatpush2.bf16.msra.mxu0 0
    %1038 = vmatprep.subr.bf16.mxu0 0
    %1039 = vmatpush2.bf16.msra.mxu0 0
    %1040 = vmatprep.subr.bf16.mxu0 0
    %1041 = vmatpush2.bf16.msra.mxu0 0
    %1042 = vmatprep.subr.bf16.mxu0 0
    %1043 = vmatpush2.bf16.msra.mxu0 0
    %1044 = vmatprep.subr.bf16.mxu0 0
    %1045 = vmatpush2.bf16.msra.mxu0 0
    %1046 = vmatprep.subr.bf16.mxu0 0
    %1047 = vmatpush2.bf16.msra.mxu0 0
    %1048 = vmatprep.mubr.bf16.mxu0 0
    %1049 = vmatmul.mubr.bf16.gmra.mxu0 %v686
    %v1050 = vpop.f32.mrf.mxu0
    %v1051 = vadd.f32 %v264, %v1050
    %v1052 = vpop.f32.mrf.mxu0
    %v1053 = vadd.f32 %v268, %v1052
    %v1054 = vpop.f32.mrf.mxu0
    %v1055 = vpop.f32.mrf.mxu0
    %1056 = vdwg.mxu0
    %1057 = vmatprep.subr.bf16.mxu0 0
    %1058 = vmatpush1.bf16.msra.mxu0 0
    %1059 = vmatprep.subr.bf16.mxu0 0
    %1060 = vmatpush1.bf16.msra.mxu0 0
    %1061 = vmatprep.subr.bf16.mxu0 0
    %1062 = vmatpush1.bf16.msra.mxu0 0
    %1063 = vmatprep.subr.bf16.mxu0 0
    %1064 = vmatpush1.bf16.msra.mxu0 0
    %1065 = vmatprep.subr.bf16.mxu0 0
    %1066 = vmatpush1.bf16.msra.mxu0 0
    %1067 = vmatprep.subr.bf16.mxu0 0
    %1068 = vmatpush1.bf16.msra.mxu0 0
    %1069 = vmatprep.subr.bf16.mxu0 %v608
    %1070 = vmatpush1.bf16.msra.mxu0 %v607
    %1071 = vmatprep.subr.bf16.mxu0 %v576
    %1072 = vmatpush1.bf16.msra.mxu0 %v575
    %1073 = vmatprep.subr.bf16.mxu0 0
    %1074 = vmatpush2.bf16.msra.mxu0 0
    %1075 = vmatprep.subr.bf16.mxu0 0
    %1076 = vmatpush2.bf16.msra.mxu0 0
    %1077 = vmatprep.subr.bf16.mxu0 0
    %1078 = vmatpush2.bf16.msra.mxu0 0
    %1079 = vmatprep.subr.bf16.mxu0 0
    %1080 = vmatpush2.bf16.msra.mxu0 0
    %1081 = vmatprep.subr.bf16.mxu0 0
    %1082 = vmatpush2.bf16.msra.mxu0 0
    %1083 = vmatprep.subr.bf16.mxu0 0
    %1084 = vmatpush2.bf16.msra.mxu0 0
    %1085 = vmatprep.subr.bf16.mxu0 0
    %1086 = vmatpush2.bf16.msra.mxu0 0
    %1087 = vmatprep.subr.bf16.mxu0 0
    %1088 = vmatpush2.bf16.msra.mxu0 0
    %1089 = vmatprep.mubr.bf16.mxu0 0
    %1090 = vmatmul.mubr.bf16.gmra.mxu0 %v686
    %v1091 = vpop.f32.mrf.mxu0
    %v1092 = vadd.f32 %v272, %v1091
    %v1093 = vpop.f32.mrf.mxu0
    %v1094 = vadd.f32 %v276, %v1093
    %v1095 = vpop.f32.mrf.mxu0
    %v1096 = vpop.f32.mrf.mxu0
    %1097 = vdwg.mxu0
    %1098 = vmatprep.subr.bf16.mxu0 0
    %1099 = vmatpush1.bf16.msra.mxu0 0
    %1100 = vmatprep.subr.bf16.mxu0 0
    %1101 = vmatpush1.bf16.msra.mxu0 0
    %1102 = vmatprep.subr.bf16.mxu0 0
    %1103 = vmatpush1.bf16.msra.mxu0 0
    %1104 = vmatprep.subr.bf16.mxu0 0
    %1105 = vmatpush1.bf16.msra.mxu0 0
    %1106 = vmatprep.subr.bf16.mxu0 0
    %1107 = vmatpush1.bf16.msra.mxu0 0
    %1108 = vmatprep.subr.bf16.mxu0 0
    %1109 = vmatpush1.bf16.msra.mxu0 0
    %1110 = vmatprep.subr.bf16.mxu0 %v610
    %1111 = vmatpush1.bf16.msra.mxu0 %v609
    %1112 = vmatprep.subr.bf16.mxu0 %v578
    %1113 = vmatpush1.bf16.msra.mxu0 %v577
    %1114 = vmatprep.subr.bf16.mxu0 0
    %1115 = vmatpush2.bf16.msra.mxu0 0
    %1116 = vmatprep.subr.bf16.mxu0 0
    %1117 = vmatpush2.bf16.msra.mxu0 0
    %1118 = vmatprep.subr.bf16.mxu0 0
    %1119 = vmatpush2.bf16.msra.mxu0 0
    %1120 = vmatprep.subr.bf16.mxu0 0
    %1121 = vmatpush2.bf16.msra.mxu0 0
    %1122 = vmatprep.subr.bf16.mxu0 0
    %1123 = vmatpush2.bf16.msra.mxu0 0
    %1124 = vmatprep.subr.bf16.mxu0 0
    %1125 = vmatpush2.bf16.msra.mxu0 0
    %1126 = vmatprep.subr.bf16.mxu0 0
    %1127 = vmatpush2.bf16.msra.mxu0 0
    %1128 = vmatprep.subr.bf16.mxu0 0
    %1129 = vmatpush2.bf16.msra.mxu0 0
    %1130 = vmatprep.mubr.bf16.mxu0 0
    %1131 = vmatmul.mubr.bf16.gmra.mxu0 %v686
    %v1132 = vpop.f32.mrf.mxu0
    %v1133 = vadd.f32 %v280, %v1132
    %v1134 = vpop.f32.mrf.mxu0
    %v1135 = vadd.f32 %v284, %v1134
    %v1136 = vpop.f32.mrf.mxu0
    %v1137 = vpop.f32.mrf.mxu0
    %1138 = vdwg.mxu0
    %1139 = vmatprep.subr.bf16.mxu0 0
    %1140 = vmatpush1.bf16.msra.mxu0 0
    %1141 = vmatprep.subr.bf16.mxu0 0
    %1142 = vmatpush1.bf16.msra.mxu0 0
    %1143 = vmatprep.subr.bf16.mxu0 0
    %1144 = vmatpush1.bf16.msra.mxu0 0
    %1145 = vmatprep.subr.bf16.mxu0 0
    %1146 = vmatpush1.bf16.msra.mxu0 0
    %1147 = vmatprep.subr.bf16.mxu0 0
    %1148 = vmatpush1.bf16.msra.mxu0 0
    %1149 = vmatprep.subr.bf16.mxu0 0
    %1150 = vmatpush1.bf16.msra.mxu0 0
    %1151 = vmatprep.subr.bf16.mxu0 %v612
    %1152 = vmatpush1.bf16.msra.mxu0 %v611
    %1153 = vmatprep.subr.bf16.mxu0 %v580
    %1154 = vmatpush1.bf16.msra.mxu0 %v579
    %1155 = vmatprep.subr.bf16.mxu0 0
    %1156 = vmatpush2.bf16.msra.mxu0 0
    %1157 = vmatprep.subr.bf16.mxu0 0
    %1158 = vmatpush2.bf16.msra.mxu0 0
    %1159 = vmatprep.subr.bf16.mxu0 0
    %1160 = vmatpush2.bf16.msra.mxu0 0
    %1161 = vmatprep.subr.bf16.mxu0 0
    %1162 = vmatpush2.bf16.msra.mxu0 0
    %1163 = vmatprep.subr.bf16.mxu0 0
    %1164 = vmatpush2.bf16.msra.mxu0 0
    %1165 = vmatprep.subr.bf16.mxu0 0
    %1166 = vmatpush2.bf16.msra.mxu0 0
    %1167 = vmatprep.subr.bf16.mxu0 0
    %1168 = vmatpush2.bf16.msra.mxu0 0
    %1169 = vmatprep.subr.bf16.mxu0 0
    %1170 = vmatpush2.bf16.msra.mxu0 0
    %1171 = vmatprep.mubr.bf16.mxu0 0
    %1172 = vmatmul.mubr.bf16.gmra.mxu0 %v686
    %v1173 = vpop.f32.mrf.mxu0
    %v1174 = vadd.f32 %v288, %v1173
    %v1175 = vpop.f32.mrf.mxu0
    %v1176 = vadd.f32 %v292, %v1175
    %v1177 = vpop.f32.mrf.mxu0
    %v1178 = vpop.f32.mrf.mxu0
    %1179 = vdwg.mxu0
    %1180 = vmatprep.subr.bf16.mxu0 0
    %1181 = vmatpush1.bf16.msra.mxu0 0
    %1182 = vmatprep.subr.bf16.mxu0 0
    %1183 = vmatpush1.bf16.msra.mxu0 0
    %1184 = vmatprep.subr.bf16.mxu0 0
    %1185 = vmatpush1.bf16.msra.mxu0 0
    %1186 = vmatprep.subr.bf16.mxu0 0
    %1187 = vmatpush1.bf16.msra.mxu0 0
    %1188 = vmatprep.subr.bf16.mxu0 0
    %1189 = vmatpush1.bf16.msra.mxu0 0
    %1190 = vmatprep.subr.bf16.mxu0 0
    %1191 = vmatpush1.bf16.msra.mxu0 0
    %1192 = vmatprep.subr.bf16.mxu0 %v614
    %1193 = vmatpush1.bf16.msra.mxu0 %v613
    %1194 = vmatprep.subr.bf16.mxu0 %v582
    %1195 = vmatpush1.bf16.msra.mxu0 %v581
    %1196 = vmatprep.subr.bf16.mxu0 0
    %1197 = vmatpush2.bf16.msra.mxu0 0
    %1198 = vmatprep.subr.bf16.mxu0 0
    %1199 = vmatpush2.bf16.msra.mxu0 0
    %1200 = vmatprep.subr.bf16.mxu0 0
    %1201 = vmatpush2.bf16.msra.mxu0 0
    %1202 = vmatprep.subr.bf16.mxu0 0
    %1203 = vmatpush2.bf16.msra.mxu0 0
    %1204 = vmatprep.subr.bf16.mxu0 0
    %1205 = vmatpush2.bf16.msra.mxu0 0
    %1206 = vmatprep.subr.bf16.mxu0 0
    %1207 = vmatpush2.bf16.msra.mxu0 0
    %1208 = vmatprep.subr.bf16.mxu0 0
    %1209 = vmatpush2.bf16.msra.mxu0 0
    %1210 = vmatprep.subr.bf16.mxu0 0
    %1211 = vmatpush2.bf16.msra.mxu0 0
    %1212 = vmatprep.mubr.bf16.mxu0 0
    %1213 = vmatmul.mubr.bf16.gmra.mxu0 %v686
    %v1214 = vpop.f32.mrf.mxu0
    %v1215 = vadd.f32 %v296, %v1214
    %v1216 = vpop.f32.mrf.mxu0
    %v1217 = vadd.f32 %v300, %v1216
    %v1218 = vpop.f32.mrf.mxu0
    %v1219 = vpop.f32.mrf.mxu0
    %1220 = vdwg.mxu0
    %1221 = vmatprep.subr.bf16.mxu0 0
    %1222 = vmatpush1.bf16.msra.mxu0 0
    %1223 = vmatprep.subr.bf16.mxu0 0
    %1224 = vmatpush1.bf16.msra.mxu0 0
    %1225 = vmatprep.subr.bf16.mxu0 0
    %1226 = vmatpush1.bf16.msra.mxu0 0
    %1227 = vmatprep.subr.bf16.mxu0 0
    %1228 = vmatpush1.bf16.msra.mxu0 0
    %1229 = vmatprep.subr.bf16.mxu0 0
    %1230 = vmatpush1.bf16.msra.mxu0 0
    %1231 = vmatprep.subr.bf16.mxu0 0
    %1232 = vmatpush1.bf16.msra.mxu0 0
    %1233 = vmatprep.subr.bf16.mxu0 %v616
    %1234 = vmatpush1.bf16.msra.mxu0 %v615
    %1235 = vmatprep.subr.bf16.mxu0 %v584
    %1236 = vmatpush1.bf16.msra.mxu0 %v583
    %1237 = vmatprep.subr.bf16.mxu0 0
    %1238 = vmatpush2.bf16.msra.mxu0 0
    %1239 = vmatprep.subr.bf16.mxu0 0
    %1240 = vmatpush2.bf16.msra.mxu0 0
    %1241 = vmatprep.subr.bf16.mxu0 0
    %1242 = vmatpush2.bf16.msra.mxu0 0
    %1243 = vmatprep.subr.bf16.mxu0 0
    %1244 = vmatpush2.bf16.msra.mxu0 0
    %1245 = vmatprep.subr.bf16.mxu0 0
    %1246 = vmatpush2.bf16.msra.mxu0 0
    %1247 = vmatprep.subr.bf16.mxu0 0
    %1248 = vmatpush2.bf16.msra.mxu0 0
    %1249 = vmatprep.subr.bf16.mxu0 0
    %1250 = vmatpush2.bf16.msra.mxu0 0
    %1251 = vmatprep.subr.bf16.mxu0 0
    %1252 = vmatpush2.bf16.msra.mxu0 0
    %1253 = vmatprep.mubr.bf16.mxu0 0
    %1254 = vmatmul.mubr.bf16.gmra.mxu0 %v686
    %v1255 = vpop.f32.mrf.mxu0
    %v1256 = vadd.f32 %v304, %v1255
    %v1257 = vpop.f32.mrf.mxu0
    %v1258 = vadd.f32 %v308, %v1257
    %v1259 = vpop.f32.mrf.mxu0
    %v1260 = vpop.f32.mrf.mxu0
    %1261 = vdwg.mxu0
    %1262 = vmatprep.subr.bf16.mxu0 0
    %1263 = vmatpush1.bf16.msra.mxu0 0
    %1264 = vmatprep.subr.bf16.mxu0 0
    %1265 = vmatpush1.bf16.msra.mxu0 0
    %1266 = vmatprep.subr.bf16.mxu0 0
    %1267 = vmatpush1.bf16.msra.mxu0 0
    %1268 = vmatprep.subr.bf16.mxu0 0
    %1269 = vmatpush1.bf16.msra.mxu0 0
    %1270 = vmatprep.subr.bf16.mxu0 0
    %1271 = vmatpush1.bf16.msra.mxu0 0
    %1272 = vmatprep.subr.bf16.mxu0 0
    %1273 = vmatpush1.bf16.msra.mxu0 0
    %1274 = vmatprep.subr.bf16.mxu0 %v618
    %1275 = vmatpush1.bf16.msra.mxu0 %v617
    %1276 = vmatprep.subr.bf16.mxu0 %v586
    %1277 = vmatpush1.bf16.msra.mxu0 %v585
    %1278 = vmatprep.subr.bf16.mxu0 0
    %1279 = vmatpush2.bf16.msra.mxu0 0
    %1280 = vmatprep.subr.bf16.mxu0 0
    %1281 = vmatpush2.bf16.msra.mxu0 0
    %1282 = vmatprep.subr.bf16.mxu0 0
    %1283 = vmatpush2.bf16.msra.mxu0 0
    %1284 = vmatprep.subr.bf16.mxu0 0
    %1285 = vmatpush2.bf16.msra.mxu0 0
    %1286 = vmatprep.subr.bf16.mxu0 0
    %1287 = vmatpush2.bf16.msra.mxu0 0
    %1288 = vmatprep.subr.bf16.mxu0 0
    %1289 = vmatpush2.bf16.msra.mxu0 0
    %1290 = vmatprep.subr.bf16.mxu0 0
    %1291 = vmatpush2.bf16.msra.mxu0 0
    %1292 = vmatprep.subr.bf16.mxu0 0
    %1293 = vmatpush2.bf16.msra.mxu0 0
    %1294 = vmatprep.mubr.bf16.mxu0 0
    %1295 = vmatmul.mubr.bf16.gmra.mxu0 %v686
    %v1296 = vpop.f32.mrf.mxu0
    %v1297 = vadd.f32 %v312, %v1296
    %v1298 = vpop.f32.mrf.mxu0
    %v1299 = vadd.f32 %v316, %v1298
    %v1300 = vpop.f32.mrf.mxu0
    %v1301 = vpop.f32.mrf.mxu0
    %1302 = vdwg.mxu0
    %1303 = vmatprep.subr.bf16.mxu0 0
    %1304 = vmatpush1.bf16.msra.mxu0 0
    %1305 = vmatprep.subr.bf16.mxu0 0
    %1306 = vmatpush1.bf16.msra.mxu0 0
    %1307 = vmatprep.subr.bf16.mxu0 0
    %1308 = vmatpush1.bf16.msra.mxu0 0
    %1309 = vmatprep.subr.bf16.mxu0 0
    %1310 = vmatpush1.bf16.msra.mxu0 0
    %1311 = vmatprep.subr.bf16.mxu0 0
    %1312 = vmatpush1.bf16.msra.mxu0 0
    %1313 = vmatprep.subr.bf16.mxu0 0
    %1314 = vmatpush1.bf16.msra.mxu0 0
    %1315 = vmatprep.subr.bf16.mxu0 %v620
    %1316 = vmatpush1.bf16.msra.mxu0 %v619
    %1317 = vmatprep.subr.bf16.mxu0 %v588
    %1318 = vmatpush1.bf16.msra.mxu0 %v587
    %1319 = vmatprep.subr.bf16.mxu0 0
    %1320 = vmatpush2.bf16.msra.mxu0 0
    %1321 = vmatprep.subr.bf16.mxu0 0
    %1322 = vmatpush2.bf16.msra.mxu0 0
    %1323 = vmatprep.subr.bf16.mxu0 0
    %1324 = vmatpush2.bf16.msra.mxu0 0
    %1325 = vmatprep.subr.bf16.mxu0 0
    %1326 = vmatpush2.bf16.msra.mxu0 0
    %1327 = vmatprep.subr.bf16.mxu0 0
    %1328 = vmatpush2.bf16.msra.mxu0 0
    %1329 = vmatprep.subr.bf16.mxu0 0
    %1330 = vmatpush2.bf16.msra.mxu0 0
    %1331 = vmatprep.subr.bf16.mxu0 0
    %1332 = vmatpush2.bf16.msra.mxu0 0
    %1333 = vmatprep.subr.bf16.mxu0 0
    %1334 = vmatpush2.bf16.msra.mxu0 0
    %1335 = vmatprep.mubr.bf16.mxu0 0
    %1336 = vmatmul.mubr.bf16.gmra.mxu0 %v686
    %v1337 = vpop.f32.mrf.mxu0
    %v1338 = vadd.f32 %v320, %v1337
    %v1339 = vpop.f32.mrf.mxu0
    %v1340 = vadd.f32 %v324, %v1339
    %v1341 = vpop.f32.mrf.mxu0
    %v1342 = vpop.f32.mrf.mxu0
    %1343 = vdwg.mxu0
    %v1344 = vmax.f32 %v723, 0.0
    %v1345 = vmax.f32 %v725, 0.0
    %v1346 = vmax.f32 %v764, 0.0
    %v1347 = vmax.f32 %v766, 0.0
    %v1348 = vmax.f32 %v805, 0.0
    %v1349 = vmax.f32 %v807, 0.0
    %v1350 = vmax.f32 %v846, 0.0
    %v1351 = vmax.f32 %v848, 0.0
    %v1352 = vmax.f32 %v887, 0.0
    %v1353 = vmax.f32 %v889, 0.0
    %v1354 = vmax.f32 %v928, 0.0
    %v1355 = vmax.f32 %v930, 0.0
    %v1356 = vmax.f32 %v969, 0.0
    %v1357 = vmax.f32 %v971, 0.0
    %v1358 = vmax.f32 %v1010, 0.0
    %v1359 = vmax.f32 %v1012, 0.0
    %v1360 = vmax.f32 %v1051, 0.0
    %v1361 = vmax.f32 %v1053, 0.0
    %v1362 = vmax.f32 %v1092, 0.0
    %v1363 = vmax.f32 %v1094, 0.0
    %v1364 = vmax.f32 %v1133, 0.0
    %v1365 = vmax.f32 %v1135, 0.0
    %v1366 = vmax.f32 %v1174, 0.0
    %v1367 = vmax.f32 %v1176, 0.0
    %v1368 = vmax.f32 %v1215, 0.0
    %v1369 = vmax.f32 %v1217, 0.0
    %v1370 = vmax.f32 %v1256, 0.0
    %v1371 = vmax.f32 %v1258, 0.0
    %v1372 = vmax.f32 %v1297, 0.0
    %v1373 = vmax.f32 %v1299, 0.0
    %v1374 = vmax.f32 %v1338, 0.0
    %v1375 = vmax.f32 %v1340, 0.0
    %v1376 = vld [vmem:[#allocation8] sm:$0xff]
    %v1377 = vld [vmem:[#allocation8 + $0x8] sm:$0xff]
    %v1378 = vld [vmem:[#allocation8 + $0x10] sm:$0xff]
    %v1379 = vld [vmem:[#allocation8 + $0x18] sm:$0xff]
    %v1384 = vlaneseq
    %v1385 = vshrl.u32 %v1384, 7
    %v1386 = vsub.s32 0, %v1385
    %v1387 = vrot.slane %v1376, %v1386
    %v1388 = vlaneseq
    %v1389 = vshrl.u32 %v1388, 7
    %v1390 = vsub.s32 1, %v1389
    %v1391 = vrot.slane %v1376, %v1390
    %v1392 = vlaneseq
    %v1393 = vshrl.u32 %v1392, 7
    %v1394 = vsub.s32 2, %v1393
    %v1395 = vrot.slane %v1376, %v1394
    %v1396 = vlaneseq
    %v1397 = vshrl.u32 %v1396, 7
    %v1398 = vsub.s32 3, %v1397
    %v1399 = vrot.slane %v1376, %v1398
    %v1400 = vlaneseq
    %v1401 = vshrl.u32 %v1400, 7
    %v1402 = vsub.s32 4, %v1401
    %v1403 = vrot.slane %v1376, %v1402
    %v1404 = vlaneseq
    %v1405 = vshrl.u32 %v1404, 7
    %v1406 = vsub.s32 5, %v1405
    %v1407 = vrot.slane %v1376, %v1406
    %v1408 = vlaneseq
    %v1409 = vshrl.u32 %v1408, 7
    %v1410 = vsub.s32 6, %v1409
    %v1411 = vrot.slane %v1376, %v1410
    %v1412 = vlaneseq
    %v1413 = vshrl.u32 %v1412, 7
    %v1414 = vsub.s32 7, %v1413
    %v1415 = vrot.slane %v1376, %v1414
    %v1416 = vlaneseq
    %v1417 = vshrl.u32 %v1416, 7
    %v1418 = vsub.s32 0, %v1417
    %v1419 = vrot.slane %v1377, %v1418
    %v1420 = vlaneseq
    %v1421 = vshrl.u32 %v1420, 7
    %v1422 = vsub.s32 1, %v1421
    %v1423 = vrot.slane %v1377, %v1422
    %v1424 = vlaneseq
    %v1425 = vshrl.u32 %v1424, 7
    %v1426 = vsub.s32 2, %v1425
    %v1427 = vrot.slane %v1377, %v1426
    %v1428 = vlaneseq
    %v1429 = vshrl.u32 %v1428, 7
    %v1430 = vsub.s32 3, %v1429
    %v1431 = vrot.slane %v1377, %v1430
    %v1432 = vlaneseq
    %v1433 = vshrl.u32 %v1432, 7
    %v1434 = vsub.s32 4, %v1433
    %v1435 = vrot.slane %v1377, %v1434
    %v1436 = vlaneseq
    %v1437 = vshrl.u32 %v1436, 7
    %v1438 = vsub.s32 5, %v1437
    %v1439 = vrot.slane %v1377, %v1438
    %v1440 = vlaneseq
    %v1441 = vshrl.u32 %v1440, 7
    %v1442 = vsub.s32 6, %v1441
    %v1443 = vrot.slane %v1377, %v1442
    %v1444 = vlaneseq
    %v1445 = vshrl.u32 %v1444, 7
    %v1446 = vsub.s32 7, %v1445
    %v1447 = vrot.slane %v1377, %v1446
    %v1448 = vlaneseq
    %v1449 = vshrl.u32 %v1448, 7
    %v1450 = vsub.s32 0, %v1449
    %v1451 = vrot.slane %v1378, %v1450
    %v1452 = vlaneseq
    %v1453 = vshrl.u32 %v1452, 7
    %v1454 = vsub.s32 1, %v1453
    %v1455 = vrot.slane %v1378, %v1454
    %v1456 = vlaneseq
    %v1457 = vshrl.u32 %v1456, 7
    %v1458 = vsub.s32 2, %v1457
    %v1459 = vrot.slane %v1378, %v1458
    %v1460 = vlaneseq
    %v1461 = vshrl.u32 %v1460, 7
    %v1462 = vsub.s32 3, %v1461
    %v1463 = vrot.slane %v1378, %v1462
    %v1464 = vlaneseq
    %v1465 = vshrl.u32 %v1464, 7
    %v1466 = vsub.s32 4, %v1465
    %v1467 = vrot.slane %v1378, %v1466
    %v1468 = vlaneseq
    %v1469 = vshrl.u32 %v1468, 7
    %v1470 = vsub.s32 5, %v1469
    %v1471 = vrot.slane %v1378, %v1470
    %v1472 = vlaneseq
    %v1473 = vshrl.u32 %v1472, 7
    %v1474 = vsub.s32 6, %v1473
    %v1475 = vrot.slane %v1378, %v1474
    %v1476 = vlaneseq
    %v1477 = vshrl.u32 %v1476, 7
    %v1478 = vsub.s32 7, %v1477
    %v1479 = vrot.slane %v1378, %v1478
    %v1480 = vlaneseq
    %v1481 = vshrl.u32 %v1480, 7
    %v1482 = vsub.s32 0, %v1481
    %v1483 = vrot.slane %v1379, %v1482
    %v1484 = vlaneseq
    %v1485 = vshrl.u32 %v1484, 7
    %v1486 = vsub.s32 1, %v1485
    %v1487 = vrot.slane %v1379, %v1486
    %v1488 = vlaneseq
    %v1489 = vshrl.u32 %v1488, 7
    %v1490 = vsub.s32 2, %v1489
    %v1491 = vrot.slane %v1379, %v1490
    %v1492 = vlaneseq
    %v1493 = vshrl.u32 %v1492, 7
    %v1494 = vsub.s32 3, %v1493
    %v1495 = vrot.slane %v1379, %v1494
    %v1496 = vlaneseq
    %v1497 = vshrl.u32 %v1496, 7
    %v1498 = vsub.s32 4, %v1497
    %v1499 = vrot.slane %v1379, %v1498
    %v1500 = vlaneseq
    %v1501 = vshrl.u32 %v1500, 7
    %v1502 = vsub.s32 5, %v1501
    %v1503 = vrot.slane %v1379, %v1502
    %v1504 = vlaneseq
    %v1505 = vshrl.u32 %v1504, 7
    %v1506 = vsub.s32 6, %v1505
    %v1507 = vrot.slane %v1379, %v1506
    %v1508 = vlaneseq
    %v1509 = vshrl.u32 %v1508, 7
    %v1510 = vsub.s32 7, %v1509
    %v1511 = vrot.slane %v1379, %v1510
    %v1544 = vmul.f32 %v1344, %v1387
    %v1545 = vmul.f32 %v1345, %v1391
    %v1546 = vmul.f32 %v1346, %v1395
    %v1547 = vmul.f32 %v1347, %v1399
    %v1548 = vmul.f32 %v1348, %v1403
    %v1549 = vmul.f32 %v1349, %v1407
    %v1550 = vmul.f32 %v1350, %v1411
    %v1551 = vmul.f32 %v1351, %v1415
    %v1552 = vmul.f32 %v1352, %v1419
    %v1553 = vmul.f32 %v1353, %v1423
    %v1554 = vmul.f32 %v1354, %v1427
    %v1555 = vmul.f32 %v1355, %v1431
    %v1556 = vmul.f32 %v1356, %v1435
    %v1557 = vmul.f32 %v1357, %v1439
    %v1558 = vmul.f32 %v1358, %v1443
    %v1559 = vmul.f32 %v1359, %v1447
    %v1560 = vmul.f32 %v1360, %v1451
    %v1561 = vmul.f32 %v1361, %v1455
    %v1562 = vmul.f32 %v1362, %v1459
    %v1563 = vmul.f32 %v1363, %v1463
    %v1564 = vmul.f32 %v1364, %v1467
    %v1565 = vmul.f32 %v1365, %v1471
    %v1566 = vmul.f32 %v1366, %v1475
    %v1567 = vmul.f32 %v1367, %v1479
    %v1568 = vmul.f32 %v1368, %v1483
    %v1569 = vmul.f32 %v1369, %v1487
    %v1570 = vmul.f32 %v1370, %v1491
    %v1571 = vmul.f32 %v1371, %v1495
    %v1572 = vmul.f32 %v1372, %v1499
    %v1573 = vmul.f32 %v1373, %v1503
    %v1574 = vmul.f32 %v1374, %v1507
    %v1575 = vmul.f32 %v1375, %v1511
    %vm1576 = vcmask 1041408
    %v1577 = vsel %vm1576, %v1544, 0.0
    %v1578 = vsel %vm1576, %v1545, 0.0
    %v1579 = vadd.f32 %v1577, %v1578
    %v1580 = vsel %vm1576, %v1546, 0.0
    %v1581 = vadd.f32 %v1579, %v1580
    %v1582 = vsel %vm1576, %v1547, 0.0
    %v1583 = vadd.f32 %v1581, %v1582
    %v1584 = vsel %vm1576, %v1548, 0.0
    %v1585 = vadd.f32 %v1583, %v1584
    %v1586 = vsel %vm1576, %v1549, 0.0
    %v1587 = vadd.f32 %v1585, %v1586
    %v1588 = vsel %vm1576, %v1550, 0.0
    %v1589 = vadd.f32 %v1587, %v1588
    %v1590 = vsel %vm1576, %v1551, 0.0
    %v1591 = vadd.f32 %v1589, %v1590
    %v1592 = vsel %vm1576, %v1552, 0.0
    %v1593 = vadd.f32 %v1591, %v1592
    %v1594 = vsel %vm1576, %v1553, 0.0
    %v1595 = vadd.f32 %v1593, %v1594
    %v1596 = vsel %vm1576, %v1554, 0.0
    %v1597 = vadd.f32 %v1595, %v1596
    %v1598 = vsel %vm1576, %v1555, 0.0
    %v1599 = vadd.f32 %v1597, %v1598
    %v1600 = vsel %vm1576, %v1556, 0.0
    %v1601 = vadd.f32 %v1599, %v1600
    %v1602 = vsel %vm1576, %v1557, 0.0
    %v1603 = vadd.f32 %v1601, %v1602
    %v1604 = vsel %vm1576, %v1558, 0.0
    %v1605 = vadd.f32 %v1603, %v1604
    %v1606 = vsel %vm1576, %v1559, 0.0
    %v1607 = vadd.f32 %v1605, %v1606
    %v1608 = vsel %vm1576, %v1560, 0.0
    %v1609 = vadd.f32 %v1607, %v1608
    %v1610 = vsel %vm1576, %v1561, 0.0
    %v1611 = vadd.f32 %v1609, %v1610
    %v1612 = vsel %vm1576, %v1562, 0.0
    %v1613 = vadd.f32 %v1611, %v1612
    %v1614 = vsel %vm1576, %v1563, 0.0
    %v1615 = vadd.f32 %v1613, %v1614
    %v1616 = vsel %vm1576, %v1564, 0.0
    %v1617 = vadd.f32 %v1615, %v1616
    %v1618 = vsel %vm1576, %v1565, 0.0
    %v1619 = vadd.f32 %v1617, %v1618
    %v1620 = vsel %vm1576, %v1566, 0.0
    %v1621 = vadd.f32 %v1619, %v1620
    %v1622 = vsel %vm1576, %v1567, 0.0
    %v1623 = vadd.f32 %v1621, %v1622
    %v1624 = vsel %vm1576, %v1568, 0.0
    %v1625 = vadd.f32 %v1623, %v1624
    %v1626 = vsel %vm1576, %v1569, 0.0
    %v1627 = vadd.f32 %v1625, %v1626
    %v1628 = vsel %vm1576, %v1570, 0.0
    %v1629 = vadd.f32 %v1627, %v1628
    %v1630 = vsel %vm1576, %v1571, 0.0
    %v1631 = vadd.f32 %v1629, %v1630
    %v1632 = vsel %vm1576, %v1572, 0.0
    %v1633 = vadd.f32 %v1631, %v1632
    %v1634 = vsel %vm1576, %v1573, 0.0
    %v1635 = vadd.f32 %v1633, %v1634
    %v1636 = vsel %vm1576, %v1574, 0.0
    %v1637 = vadd.f32 %v1635, %v1636
    %v1638 = vsel %vm1576, %v1575, 0.0
    %v1639 = vadd.f32 %v1637, %v1638
    %1640 = vadd.xlane.f32.xlu0 %v1639
    %v1641 = vpop.xlane.xlu0 %1640
    %s1642 = sld [smem:[#allocation2]]
    %v1643 = vstv %s1642
    %v1644 = vadd.f32 %v1641, %v1643
    %vm1645 = vcmask 1024
    %1646 = vst.msk [vmem:[%s6] sm:$0x3] %vm1645, %v1644
    // Predicated region
    $region42: #{tpu_custom_call.1} parent=1 // pred_check
      _
    $region43: #{tpu_custom_call.1} parent=1 // pred_check_branch
      %1648 = sbr.rel (0) target = $region45
    $region44: #{tpu_custom_call.1} parent=1 // pred_region
      _
    $region45: #{tpu_custom_call.1} parent=1 // pred_fallthru
      _
    // Predicated region
    $region46: #{tpu_custom_call.1} parent=1 // pred_check
      _
    $region47: #{tpu_custom_call.1} parent=1 // pred_check_branch
      %1650 = sbr.rel (0) target = $region49
    $region48: #{tpu_custom_call.1} parent=1 // pred_region
      _
    $region49: #{tpu_custom_call.1} parent=1 // pred_fallthru
      _
    %1651 = vsyncpa [#allocation4], 1
    %1652 = vsyncpa [#allocation6], 1
    %1653 = vsyncpa [#allocation9], 1

</llo_original>
